<compile_context>
chip_gen: v5e
topology: v5e:2x2
jax: 0.10.0
libtpu: 0.0.40
codegen_flags: <defaults>
</compile_context>

<pallas_src>
import jax
import jax.numpy as jnp
from jax.experimental import pallas as pl
from jax.experimental.pallas import tpu as pltpu


def _round_up(x: int, m: int) -> int:
    return (x + m - 1) // m * m


def _cdiv(a: int, b: int) -> int:
    return -(-a // b)


def _pick_tile_b(batch: int, desired: int = 4096) -> int:
    """Batch tile (the lane dim in the transposed formulation).

    Multiple of 128, big enough to amortize per-grid-step overhead, >=2 grid steps
    whenever possible (v7x megacore), and <=12.5% zero-padding waste.
    """
    b128 = _round_up(max(batch, 1), 128)
    if b128 <= 128:
        return 128
    cap = min(desired, _round_up(_cdiv(b128, 2), 128))
    t = cap
    while t > 128:
        pad = _round_up(b128, t) - b128
        if pad * 8 <= b128:          # <= 12.5% padded rows
            return t
        t -= 128
    return 128


def _ff_full_kernel(xT_ref, w1T_ref, b1_ref, w2T_ref, b2_ref, whT_ref, bh_ref, outT_ref):
    # Transposed formulation: batch lives on lanes everywhere, so every MXU result,
    # the bias-add/ReLU epilogue and the final store are lane-dense and unmasked.
    xT = xT_ref[...]                                                        # (obs, TB) f32
    h1 = jnp.dot(w1T_ref[...], xT, preferred_element_type=jnp.float32)      # (hid, TB)
    h1 = jnp.maximum(h1 + b1_ref[...], 0.0)
    h2 = jnp.dot(w2T_ref[...], h1, preferred_element_type=jnp.float32)      # (hid, TB)
    h2 = jnp.maximum(h2 + b2_ref[...], 0.0)
    v = jnp.dot(whT_ref[...], h2, preferred_element_type=jnp.float32)       # (out, TB)
    outT_ref[...] = (v + bh_ref[...]).astype(outT_ref.dtype)


def ff_full_net(x, w1, b1, w2, b2, wh, bh, *, tile_b=None):
    """head(body(x)) fused in one Pallas kernel. x: [B, obs_dim] f32 -> [B, out_dim] f32."""
    B, obs_dim = x.shape
    hidden = w1.shape[1]
    out_dim = wh.shape[1]

    if tile_b is None:
        tile_b = _pick_tile_b(B)
    else:
        tile_b = max(128, _round_up(tile_b, 128))
    B_P = _round_up(B, tile_b)
    grid = (B_P // tile_b,)

    f32 = jnp.float32
    # Batch-on-lanes inputs: one cheap transpose/zero-pad of x (only obs_dim columns,
    # no 128-lane padding, no bf16 copy); weights/biases transposed once and tiny.
    xT = jnp.pad(x.astype(f32).T, ((0, 0), (0, B_P - B)))   # (obs, B_P)
    w1T = w1.astype(f32).T                                  # (hid, obs)
    w2T = w2.astype(f32).T                                  # (hid, hid)
    whT = wh.astype(f32).T                                  # (out, hid)
    b1c = b1.astype(f32).reshape(hidden, 1)                 # (hid, 1)
    b2c = b2.astype(f32).reshape(hidden, 1)                 # (hid, 1)
    bhc = bh.astype(f32).reshape(out_dim, 1)                # (out, 1)

    flops = 2 * B_P * (obs_dim * hidden + hidden * hidden + hidden * out_dim)
    bytes_accessed = 4 * (
        obs_dim * B_P + out_dim * B_P                                   # x in, result out
        + obs_dim * hidden + hidden * hidden + hidden * out_dim         # weights
        + 2 * hidden + out_dim                                          # biases
    )

    outT = pl.pallas_call(
        _ff_full_kernel,
        out_shape=jax.ShapeDtypeStruct((out_dim, B_P), f32),
        grid=grid,
        in_specs=[
            # Streamed, batch-tiled activations (batch on lanes).
            pl.BlockSpec((obs_dim, tile_b), lambda i: (0, i)),
            # Weights / biases: constant index_map -> fetched once, VMEM-resident.
            pl.BlockSpec((hidden, obs_dim), lambda i: (0, 0)),
            pl.BlockSpec((hidden, 1), lambda i: (0, 0)),
            pl.BlockSpec((hidden, hidden), lambda i: (0, 0)),
            pl.BlockSpec((hidden, 1), lambda i: (0, 0)),
            pl.BlockSpec((out_dim, hidden), lambda i: (0, 0)),
            pl.BlockSpec((out_dim, 1), lambda i: (0, 0)),
        ],
        # Lane-dense (out_dim, tile_b) output blocks — no 128-wide f32 slab.
        out_specs=pl.BlockSpec((out_dim, tile_b), lambda i: (0, i)),
        compiler_params=pltpu.CompilerParams(
            dimension_semantics=("parallel",),   # batch axis shards across v7x's 2 TCs
        ),
        cost_estimate=pl.CostEstimate(
            flops=flops, transcendentals=0, bytes_accessed=bytes_accessed),
    )(xT, w1T, b1c, w2T, b2c, whT, bhc)

    # Tiny (out_dim, B_P) -> (B, out_dim) fixup; negligible traffic.
    return outT[:, :B].T


def _init_linear(key, fan_in, fan_out):
    """Deterministic init mimicking torch.nn.Linear default (uniform +-1/sqrt(fan_in))."""
    kw, kb = jax.random.split(key)
    bound = 1.0 / jnp.sqrt(float(fan_in))
    w = jax.random.uniform(kw, (fan_in, fan_out), jnp.float32, -bound, bound)
    b = jax.random.uniform(kb, (1, fan_out), jnp.float32, -bound, bound)
    return w, b


def _reference(x, w1, b1, w2, b2, wh, bh):
    hp = jax.lax.Precision.HIGHEST
    h1 = jnp.maximum(jnp.dot(x, w1, precision=hp) + b1, 0.0)
    h2 = jnp.maximum(jnp.dot(h1, w2, precision=hp) + b2, 0.0)
    return jnp.dot(h2, wh, precision=hp) + bh


if __name__ == "__main__":
    batch, obs_dim, hidden, out_dim = 8, 32, 64, 1

    root = jax.random.PRNGKey(0)
    kx, k1, k2, kh = jax.random.split(root, 4)

    x = jax.random.normal(kx, (batch, obs_dim), jnp.float32)
    w1, b1 = _init_linear(k1, obs_dim, hidden)
    w2, b2 = _init_linear(k2, hidden, hidden)
    wh, bh = _init_linear(kh, hidden, out_dim)

    out = ff_full_net(x, w1, b1, w2, b2, wh, bh)
    out = jax.block_until_ready(out)

    ref = _reference(x, w1, b1, w2, b2, wh, bh)
    assert out.shape == (batch, out_dim)
    # f32 MXU path; generous tolerance covers any bf16-pass dot decomposition.
    assert jnp.allclose(out, ref, atol=2e-2, rtol=2e-2), "mismatch vs pure-JAX reference"

    print("KERNEL_OK")
</pallas_src>

<mosaic_0001>
module attributes {stable_mosaic.version = 11 : i64} {
  func.func @_ff_full_kernel(%arg0: i32, %arg1: memref<32x128xf32, #tpu.memory_space<vmem>>, %arg2: memref<64x32xf32, #tpu.memory_space<vmem>>, %arg3: memref<64x1xf32, #tpu.memory_space<vmem>>, %arg4: memref<64x64xf32, #tpu.memory_space<vmem>>, %arg5: memref<64x1xf32, #tpu.memory_space<vmem>>, %arg6: memref<1x64xf32, #tpu.memory_space<vmem>>, %arg7: memref<1x1xf32, #tpu.memory_space<vmem>>, %arg8: memref<1x128xf32, #tpu.memory_space<vmem>>) attributes {dimension_semantics = [#tpu.dimension_semantics<parallel>], iteration_bounds = array<i64: 1>, scalar_prefetch = 0 : i64, scratch_operands = 0 : i64, tpu.core_type = #tpu.core_type<tc>, window_params = [{transform_indices = @transform_0, window_bounds = array<i64: 32, 128>}, {pipeline_mode = #tpu.pipeline_mode<synchronous>, transform_indices = @transform_1, window_bounds = array<i64: 64, 32>}, {pipeline_mode = #tpu.pipeline_mode<synchronous>, transform_indices = @transform_2, window_bounds = array<i64: 64, 1>}, {pipeline_mode = #tpu.pipeline_mode<synchronous>, transform_indices = @transform_3, window_bounds = array<i64: 64, 64>}, {pipeline_mode = #tpu.pipeline_mode<synchronous>, transform_indices = @transform_4, window_bounds = array<i64: 64, 1>}, {pipeline_mode = #tpu.pipeline_mode<synchronous>, transform_indices = @transform_5, window_bounds = array<i64: 1, 64>}, {pipeline_mode = #tpu.pipeline_mode<synchronous>, transform_indices = @transform_6, window_bounds = array<i64: 1, 1>}, {transform_indices = @transform_7, window_bounds = array<i64: 1, 128>}]} {
    %c0 = arith.constant 0 : index
    %c0_0 = arith.constant 0 : index
    %0 = vector.load %arg1[%c0, %c0_0] : memref<32x128xf32, #tpu.memory_space<vmem>>, vector<32x128xf32>
    %c0_1 = arith.constant 0 : index
    %c0_2 = arith.constant 0 : index
    %1 = vector.load %arg2[%c0_1, %c0_2] : memref<64x32xf32, #tpu.memory_space<vmem>>, vector<64x32xf32>
    %cst = arith.constant dense<0.000000e+00> : vector<64x128xf32>
    %2 = tpu.matmul %1, %0, %cst {dimension_numbers = #tpu.dot_dimension_numbers<[1], [0], [0], [1], [0, 0, 1, 1], [], []>} : vector<64x32xf32>, vector<32x128xf32>, vector<64x128xf32> -> vector<64x128xf32>
    %c0_3 = arith.constant 0 : index
    %c0_4 = arith.constant 0 : index
    %3 = vector.load %arg3[%c0_3, %c0_4] : memref<64x1xf32, #tpu.memory_space<vmem>>, vector<64x1xf32>
    %4 = vector.broadcast %3 : vector<64x1xf32> to vector<64x128xf32>
    %5 = arith.addf %2, %4 : vector<64x128xf32>
    %cst_5 = arith.constant 0.000000e+00 : f32
    %6 = vector.broadcast %cst_5 : f32 to vector<64x128xf32>
    %7 = arith.maximumf %5, %6 : vector<64x128xf32>
    %c0_6 = arith.constant 0 : index
    %c0_7 = arith.constant 0 : index
    %8 = vector.load %arg4[%c0_6, %c0_7] : memref<64x64xf32, #tpu.memory_space<vmem>>, vector<64x64xf32>
    %cst_8 = arith.constant dense<0.000000e+00> : vector<64x128xf32>
    %9 = tpu.matmul %8, %7, %cst_8 {dimension_numbers = #tpu.dot_dimension_numbers<[1], [0], [0], [1], [0, 0, 1, 1], [], []>} : vector<64x64xf32>, vector<64x128xf32>, vector<64x128xf32> -> vector<64x128xf32>
    %c0_9 = arith.constant 0 : index
    %c0_10 = arith.constant 0 : index
    %10 = vector.load %arg5[%c0_9, %c0_10] : memref<64x1xf32, #tpu.memory_space<vmem>>, vector<64x1xf32>
    %11 = vector.broadcast %10 : vector<64x1xf32> to vector<64x128xf32>
    %12 = arith.addf %9, %11 : vector<64x128xf32>
    %cst_11 = arith.constant 0.000000e+00 : f32
    %13 = vector.broadcast %cst_11 : f32 to vector<64x128xf32>
    %14 = arith.maximumf %12, %13 : vector<64x128xf32>
    %c0_12 = arith.constant 0 : index
    %c0_13 = arith.constant 0 : index
    %15 = vector.load %arg6[%c0_12, %c0_13] : memref<1x64xf32, #tpu.memory_space<vmem>>, vector<1x64xf32>
    %cst_14 = arith.constant dense<0.000000e+00> : vector<1x128xf32>
    %16 = tpu.matmul %15, %14, %cst_14 {dimension_numbers = #tpu.dot_dimension_numbers<[1], [0], [0], [1], [0, 0, 1, 1], [], []>} : vector<1x64xf32>, vector<64x128xf32>, vector<1x128xf32> -> vector<1x128xf32>
    %c0_15 = arith.constant 0 : index
    %c0_16 = arith.constant 0 : index
    %17 = vector.load %arg7[%c0_15, %c0_16] : memref<1x1xf32, #tpu.memory_space<vmem>>, vector<1x1xf32>
    %18 = vector.broadcast %17 : vector<1x1xf32> to vector<1x128xf32>
    %19 = arith.addf %16, %18 : vector<1x128xf32>
    %c0_17 = arith.constant 0 : index
    %c0_18 = arith.constant 0 : index
    %20 = vector.load %arg8[%c0_17, %c0_18] : memref<1x128xf32, #tpu.memory_space<vmem>>, vector<1x128xf32>
    tpu.vector_store %arg8[%c0_17, %c0_18], %19 {strides = array<i32>} : memref<1x128xf32, #tpu.memory_space<vmem>>, vector<1x128xf32>,
    return
  }
  func.func @transform_0(%arg0: i32) -> (i32, i32) {
    %c0_i32 = arith.constant 0 : i32
    %c0_i32_0 = arith.constant 0 : i32
    return %c0_i32, %arg0 : i32, i32
  }
  func.func @transform_1(%arg0: i32) -> (i32, i32) {
    %c0_i32 = arith.constant 0 : i32
    %c0_i32_0 = arith.constant 0 : i32
    %c0_i32_1 = arith.constant 0 : i32
    return %c0_i32, %c0_i32_0 : i32, i32
  }
  func.func @transform_2(%arg0: i32) -> (i32, i32) {
    %c0_i32 = arith.constant 0 : i32
    %c0_i32_0 = arith.constant 0 : i32
    %c0_i32_1 = arith.constant 0 : i32
    return %c0_i32, %c0_i32_0 : i32, i32
  }
  func.func @transform_3(%arg0: i32) -> (i32, i32) {
    %c0_i32 = arith.constant 0 : i32
    %c0_i32_0 = arith.constant 0 : i32
    %c0_i32_1 = arith.constant 0 : i32
    return %c0_i32, %c0_i32_0 : i32, i32
  }
  func.func @transform_4(%arg0: i32) -> (i32, i32) {
    %c0_i32 = arith.constant 0 : i32
    %c0_i32_0 = arith.constant 0 : i32
    %c0_i32_1 = arith.constant 0 : i32
    return %c0_i32, %c0_i32_0 : i32, i32
  }
  func.func @transform_5(%arg0: i32) -> (i32, i32) {
    %c0_i32 = arith.constant 0 : i32
    %c0_i32_0 = arith.constant 0 : i32
    %c0_i32_1 = arith.constant 0 : i32
    return %c0_i32, %c0_i32_0 : i32, i32
  }
  func.func @transform_6(%arg0: i32) -> (i32, i32) {
    %c0_i32 = arith.constant 0 : i32
    %c0_i32_0 = arith.constant 0 : i32
    %c0_i32_1 = arith.constant 0 : i32
    return %c0_i32, %c0_i32_0 : i32, i32
  }
  func.func @transform_7(%arg0: i32) -> (i32, i32) {
    %c0_i32 = arith.constant 0 : i32
    %c0_i32_0 = arith.constant 0 : i32
    return %c0_i32, %arg0 : i32, i32
  }
}

</mosaic_0001>

<llo_original>
// kernel: tpu_custom_call.1
$region0: #{tpu_custom_call.1}
  #allocation0 [shape = 'u32[]', space=smem, size = 0x4, offset = 0x4, fixed_abs, tag = 'smem constant byte address 0x4 - core index']
  #allocation1 [shape = 'u32[72,128]{1,0:T(1,128)}', space=vmem, size = 0x9000, scoped, tag = 'internal scratch']
  #allocation2 [shape = 'f32[1,1]{1,0:T(1,128)S(1)}', space=vmem, size = 0x200, scoped, tag = 'scoped memory for tpu_custom_call.1']
  %s0 = inlined_call_operand.vmem [shape: f32[32,128], index: 0, kind: input, shape index: {}]
  %s1 = inlined_call_operand.vmem [shape: f32[64,32], index: 1, kind: input, shape index: {}]
  %s2 = inlined_call_operand.vmem [shape: f32[64,1], index: 2, kind: input, shape index: {}]
  %s3 = inlined_call_operand.vmem [shape: f32[64,64], index: 3, kind: input, shape index: {}]
  %s4 = inlined_call_operand.vmem [shape: f32[64,1], index: 4, kind: input, shape index: {}]
  %s5 = inlined_call_operand.vmem [shape: f32[1,64], index: 5, kind: input, shape index: {}]
  %s6 = inlined_call_operand.<no memory space> [shape: f32[1,1], index: 6, kind: input, shape index: {}]
  %s7 = inlined_call_operand.hbm [shape: f32[1,128], index: 7, kind: output, shape index: {}]
  %s8 = sld [smem:[#allocation0]]
  $region38: #{tpu_custom_call.1} parent=0
    _
  %s10 = ssub.s32 1, %s8
  %s11 = scalar_select 0, %s10, %s8
  %v12 = vstv %s6
  %13 = vst [vmem:[#allocation2] sm:$0x1] %v12
  $region1: #{tpu_custom_call.1} parent=0
    #allocation3 [shape = 'u8[512]{0}', space=vmem, size = 0x400, scoped, tag = 'output window, operand 0, single buffered']
    #allocation4 [shape = 's32[1]{0}', space=sflag, size = 0x4, scoped, tag = 'scoped memory for tpu_custom_call.1']
    %14 = vsyncpa [#allocation4], 0
    // Predicated region
    $region2: #{tpu_custom_call.1} parent=1 // pred_check
      _
    $region3: #{tpu_custom_call.1} parent=1 // pred_check_branch
      %16 = sbr.rel (0) target = $region5
    $region4: #{tpu_custom_call.1} parent=1 // pred_region
      _
    $region5: #{tpu_custom_call.1} parent=1 // pred_fallthru
      _
    // Predicated region
    $region6: #{tpu_custom_call.1} parent=1 // pred_check
      _
    $region7: #{tpu_custom_call.1} parent=1 // pred_check_branch
      %18 = sbr.rel (0) target = $region9
    $region8: #{tpu_custom_call.1} parent=1 // pred_region
      _
    $region9: #{tpu_custom_call.1} parent=1 // pred_fallthru
      _
    // Predicated region
    $region10: #{tpu_custom_call.1} parent=1 // pred_check
      _
    $region11: #{tpu_custom_call.1} parent=1 // pred_check_branch
      %20 = sbr.rel (0) target = $region13
    $region12: #{tpu_custom_call.1} parent=1 // pred_region
      _
    $region13: #{tpu_custom_call.1} parent=1 // pred_fallthru
      _
    // Predicated region
    $region14: #{tpu_custom_call.1} parent=1 // pred_check
      _
    $region15: #{tpu_custom_call.1} parent=1 // pred_check_branch
      %22 = sbr.rel (0) target = $region17
    $region16: #{tpu_custom_call.1} parent=1 // pred_region
      _
    $region17: #{tpu_custom_call.1} parent=1 // pred_fallthru
      _
    // Predicated region
    $region18: #{tpu_custom_call.1} parent=1 // pred_check
      _
    $region19: #{tpu_custom_call.1} parent=1 // pred_check_branch
      %24 = sbr.rel (0) target = $region21
    $region20: #{tpu_custom_call.1} parent=1 // pred_region
      _
    $region21: #{tpu_custom_call.1} parent=1 // pred_fallthru
      _
    // Predicated region
    $region22: #{tpu_custom_call.1} parent=1 // pred_check
      _
    $region23: #{tpu_custom_call.1} parent=1 // pred_check_branch
      %26 = sbr.rel (0) target = $region25
    $region24: #{tpu_custom_call.1} parent=1 // pred_region
      _
    $region25: #{tpu_custom_call.1} parent=1 // pred_fallthru
      _
    // Predicated region
    $region26: #{tpu_custom_call.1} parent=1 // pred_check
      _
    $region27: #{tpu_custom_call.1} parent=1 // pred_check_branch
      %28 = sbr.rel (0) target = $region29
    $region28: #{tpu_custom_call.1} parent=1 // pred_region
      _
    $region29: #{tpu_custom_call.1} parent=1 // pred_fallthru
      _
    %v29 = vld [vmem:[%s0] sm:$0xff]
    %v30 = vld [vmem:[%s0 + $0x8] sm:$0xff]
    %v31 = vld [vmem:[%s0 + $0x10] sm:$0xff]
    %v32 = vld [vmem:[%s0 + $0x18] sm:$0xff]
    %v33 = vld [vmem:[%s1] sm:$0xff]
    %v34 = vld [vmem:[%s1 + $0x8] sm:$0xff]
    %v35 = vld [vmem:[%s1 + $0x10] sm:$0xff]
    %v36 = vld [vmem:[%s1 + $0x18] sm:$0xff]
    %v37 = vld [vmem:[%s1 + $0x20] sm:$0xff]
    %v38 = vld [vmem:[%s1 + $0x28] sm:$0xff]
    %v39 = vld [vmem:[%s1 + $0x30] sm:$0xff]
    %v40 = vld [vmem:[%s1 + $0x38] sm:$0xff]
    %v41 = vld [vmem:[%s2] sm:$0xff]
    %v42 = vld [vmem:[%s2 + $0x8] sm:$0xff]
    %v43 = vld [vmem:[%s2 + $0x10] sm:$0xff]
    %v44 = vld [vmem:[%s2 + $0x18] sm:$0xff]
    %v45 = vld [vmem:[%s2 + $0x20] sm:$0xff]
    %v46 = vld [vmem:[%s2 + $0x28] sm:$0xff]
    %v47 = vld [vmem:[%s2 + $0x30] sm:$0xff]
    %v48 = vld [vmem:[%s2 + $0x38] sm:$0xff]
    %50 = vset.pattern.permute.xlu0 0
    %51 = vperm.xlu0 %50, %v41
    %v52 = vpop.permute.xlu0 %51
    %55 = vset.pattern.permute.xlu0 0
    %56 = vperm.xlu0 %55, %v42
    %v57 = vpop.permute.xlu0 %56
    %60 = vset.pattern.permute.xlu0 0
    %61 = vperm.xlu0 %60, %v43
    %v62 = vpop.permute.xlu0 %61
    %65 = vset.pattern.permute.xlu0 0
    %66 = vperm.xlu0 %65, %v44
    %v67 = vpop.permute.xlu0 %66
    %70 = vset.pattern.permute.xlu0 0
    %71 = vperm.xlu0 %70, %v45
    %v72 = vpop.permute.xlu0 %71
    %75 = vset.pattern.permute.xlu0 0
    %76 = vperm.xlu0 %75, %v46
    %v77 = vpop.permute.xlu0 %76
    %80 = vset.pattern.permute.xlu0 0
    %81 = vperm.xlu0 %80, %v47
    %v82 = vpop.permute.xlu0 %81
    %85 = vset.pattern.permute.xlu0 0
    %86 = vperm.xlu0 %85, %v48
    %v87 = vpop.permute.xlu0 %86
    %vm89 = vcmask 261120
    %v91 = vsel %vm89, %v33, 0
    %v94 = vsel %vm89, %v34, 0
    %v97 = vsel %vm89, %v35, 0
    %v100 = vsel %vm89, %v36, 0
    %v103 = vsel %vm89, %v37, 0
    %v106 = vsel %vm89, %v38, 0
    %v109 = vsel %vm89, %v39, 0
    %v112 = vsel %vm89, %v40, 0
    %114 = vmatpush.msra.mxu0 0.0
    %115 = vmatpush.msra.mxu0 0.0
    %116 = vmatpush.msra.mxu0 0.0
    %117 = vmatpush.msra.mxu0 0.0
    %118 = vmatpush.msra.mxu0 0.0
    %119 = vmatpush.msra.mxu0 0.0
    %120 = vmatpush.msra.mxu0 0.0
    %121 = vmatpush.msra.mxu0 0.0
    %122 = vmatpush.msra.mxu0 0.0
    %123 = vmatpush.msra.mxu0 0.0
    %124 = vmatpush.msra.mxu0 0.0
    %125 = vmatpush.msra.mxu0 0.0
    %126 = vmatpush.msra.mxu0 %v32
    %127 = vmatpush.msra.mxu0 %v31
    %128 = vmatpush.msra.mxu0 %v30
    %129 = vmatpush.msra.mxu0 %v29
    %130 = vmatmul.f32.gmra.mxu0 %v91
    %v131 = vpop.f32.mrf.mxu0
    %v132 = vadd.f32 %v52, %v131
    %133 = vmatmul.f32.gmra.mxu0 %v94
    %v134 = vpop.f32.mrf.mxu0
    %v135 = vadd.f32 %v57, %v134
    %136 = vmatmul.f32.gmra.mxu0 %v97
    %v137 = vpop.f32.mrf.mxu0
    %v138 = vadd.f32 %v62, %v137
    %139 = vmatmul.f32.gmra.mxu0 %v100
    %v140 = vpop.f32.mrf.mxu0
    %v141 = vadd.f32 %v67, %v140
    %142 = vmatmul.f32.gmra.mxu0 %v103
    %v143 = vpop.f32.mrf.mxu0
    %v144 = vadd.f32 %v72, %v143
    %145 = vmatmul.f32.gmra.mxu0 %v106
    %v146 = vpop.f32.mrf.mxu0
    %v147 = vadd.f32 %v77, %v146
    %148 = vmatmul.f32.gmra.mxu0 %v109
    %v149 = vpop.f32.mrf.mxu0
    %v150 = vadd.f32 %v82, %v149
    %151 = vmatmul.f32.gmra.mxu0 %v112
    %v152 = vpop.f32.mrf.mxu0
    %v153 = vadd.f32 %v87, %v152
    %154 = vdwg.mxu0
    %v155 = vmax.f32 %v132, 0.0
    %v156 = vmax.f32 %v135, 0.0
    %v157 = vmax.f32 %v138, 0.0
    %v158 = vmax.f32 %v141, 0.0
    %v159 = vmax.f32 %v144, 0.0
    %v160 = vmax.f32 %v147, 0.0
    %v161 = vmax.f32 %v150, 0.0
    %v162 = vmax.f32 %v153, 0.0
    %v163 = vld [vmem:[%s3] sm:$0xff]
    %v164 = vld [vmem:[%s3 + $0x8] sm:$0xff]
    %v165 = vld [vmem:[%s3 + $0x10] sm:$0xff]
    %v166 = vld [vmem:[%s3 + $0x18] sm:$0xff]
    %v167 = vld [vmem:[%s3 + $0x20] sm:$0xff]
    %v168 = vld [vmem:[%s3 + $0x28] sm:$0xff]
    %v169 = vld [vmem:[%s3 + $0x30] sm:$0xff]
    %v170 = vld [vmem:[%s3 + $0x38] sm:$0xff]
    %v171 = vld [vmem:[%s4] sm:$0xff]
    %v172 = vld [vmem:[%s4 + $0x8] sm:$0xff]
    %v173 = vld [vmem:[%s4 + $0x10] sm:$0xff]
    %v174 = vld [vmem:[%s4 + $0x18] sm:$0xff]
    %v175 = vld [vmem:[%s4 + $0x20] sm:$0xff]
    %v176 = vld [vmem:[%s4 + $0x28] sm:$0xff]
    %v177 = vld [vmem:[%s4 + $0x30] sm:$0xff]
    %v178 = vld [vmem:[%s4 + $0x38] sm:$0xff]
    %180 = vset.pattern.permute.xlu0 0
    %181 = vperm.xlu0 %180, %v171
    %v182 = vpop.permute.xlu0 %181
    %185 = vset.pattern.permute.xlu0 0
    %186 = vperm.xlu0 %185, %v172
    %v187 = vpop.permute.xlu0 %186
    %190 = vset.pattern.permute.xlu0 0
    %191 = vperm.xlu0 %190, %v173
    %v192 = vpop.permute.xlu0 %191
    %195 = vset.pattern.permute.xlu0 0
    %196 = vperm.xlu0 %195, %v174
    %v197 = vpop.permute.xlu0 %196
    %200 = vset.pattern.permute.xlu0 0
    %201 = vperm.xlu0 %200, %v175
    %v202 = vpop.permute.xlu0 %201
    %205 = vset.pattern.permute.xlu0 0
    %206 = vperm.xlu0 %205, %v176
    %v207 = vpop.permute.xlu0 %206
    %210 = vset.pattern.permute.xlu0 0
    %211 = vperm.xlu0 %210, %v177
    %v212 = vpop.permute.xlu0 %211
    %215 = vset.pattern.permute.xlu0 0
    %216 = vperm.xlu0 %215, %v178
    %v217 = vpop.permute.xlu0 %216
    %vm219 = vcmask 523264
    %v221 = vsel %vm219, %v163, 0
    %v224 = vsel %vm219, %v164, 0
    %v227 = vsel %vm219, %v165, 0
    %v230 = vsel %vm219, %v166, 0
    %v233 = vsel %vm219, %v167, 0
    %v236 = vsel %vm219, %v168, 0
    %v239 = vsel %vm219, %v169, 0
    %v242 = vsel %vm219, %v170, 0
    %244 = vmatpush.msra.mxu0 0.0
    %245 = vmatpush.msra.mxu0 0.0
    %246 = vmatpush.msra.mxu0 0.0
    %247 = vmatpush.msra.mxu0 0.0
    %248 = vmatpush.msra.mxu0 0.0
    %249 = vmatpush.msra.mxu0 0.0
    %250 = vmatpush.msra.mxu0 0.0
    %251 = vmatpush.msra.mxu0 0.0
    %252 = vmatpush.msra.mxu0 %v162
    %253 = vmatpush.msra.mxu0 %v161
    %254 = vmatpush.msra.mxu0 %v160
    %255 = vmatpush.msra.mxu0 %v159
    %256 = vmatpush.msra.mxu0 %v158
    %257 = vmatpush.msra.mxu0 %v157
    %258 = vmatpush.msra.mxu0 %v156
    %259 = vmatpush.msra.mxu0 %v155
    %260 = vmatmul.f32.gmra.mxu0 %v221
    %v261 = vpop.f32.mrf.mxu0
    %v262 = vadd.f32 %v182, %v261
    %263 = vmatmul.f32.gmra.mxu0 %v224
    %v264 = vpop.f32.mrf.mxu0
    %v265 = vadd.f32 %v187, %v264
    %266 = vmatmul.f32.gmra.mxu0 %v227
    %v267 = vpop.f32.mrf.mxu0
    %v268 = vadd.f32 %v192, %v267
    %269 = vmatmul.f32.gmra.mxu0 %v230
    %v270 = vpop.f32.mrf.mxu0
    %v271 = vadd.f32 %v197, %v270
    %272 = vmatmul.f32.gmra.mxu0 %v233
    %v273 = vpop.f32.mrf.mxu0
    %v274 = vadd.f32 %v202, %v273
    %275 = vmatmul.f32.gmra.mxu0 %v236
    %v276 = vpop.f32.mrf.mxu0
    %v277 = vadd.f32 %v207, %v276
    %278 = vmatmul.f32.gmra.mxu0 %v239
    %v279 = vpop.f32.mrf.mxu0
    %v280 = vadd.f32 %v212, %v279
    %281 = vmatmul.f32.gmra.mxu0 %v242
    %v282 = vpop.f32.mrf.mxu0
    %v283 = vadd.f32 %v217, %v282
    %284 = vdwg.mxu0
    %v285 = vmax.f32 %v262, 0.0
    %v286 = vmax.f32 %v265, 0.0
    %v287 = vmax.f32 %v268, 0.0
    %v288 = vmax.f32 %v271, 0.0
    %v289 = vmax.f32 %v274, 0.0
    %v290 = vmax.f32 %v277, 0.0
    %v291 = vmax.f32 %v280, 0.0
    %v292 = vmax.f32 %v283, 0.0
    %v293 = vld [vmem:[%s5] sm:$0x1]
    %v294 = vld [vmem:[#allocation2] sm:$0x1]
    %296 = vset.pattern.permute.xlu0 0
    %297 = vperm.xlu0 %296, %v294
    %v298 = vpop.permute.xlu0 %297
    %v300 = vperm.slane %v298, 0
    %v302 = vsel %vm219, %v293, 0
    %304 = vmatpush.msra.mxu0 0.0
    %305 = vmatpush.msra.mxu0 0.0
    %306 = vmatpush.msra.mxu0 0.0
    %307 = vmatpush.msra.mxu0 0.0
    %308 = vmatpush.msra.mxu0 0.0
    %309 = vmatpush.msra.mxu0 0.0
    %310 = vmatpush.msra.mxu0 0.0
    %311 = vmatpush.msra.mxu0 0.0
    %312 = vmatpush.msra.mxu0 %v292
    %313 = vmatpush.msra.mxu0 %v291
    %314 = vmatpush.msra.mxu0 %v290
    %315 = vmatpush.msra.mxu0 %v289
    %316 = vmatpush.msra.mxu0 %v288
    %317 = vmatpush.msra.mxu0 %v287
    %318 = vmatpush.msra.mxu0 %v286
    %319 = vmatpush.msra.mxu0 %v285
    %320 = vmatmul.f32.gmra.mxu0 %v302
    %v321 = vpop.f32.mrf.mxu0
    %v322 = vadd.f32 %v300, %v321
    %323 = vdwg.mxu0
    %324 = vst [vmem:[#allocation3] sm:$0x1] %v322
    // Predicated region
    $region30: #{tpu_custom_call.1} parent=1 // pred_check
      _
    $region31: #{tpu_custom_call.1} parent=1 // pred_check_branch
      %326 = sbr.rel (0) target = $region33
    $region32: #{tpu_custom_call.1} parent=1 // pred_region
      %328 = vsyncadd [#allocation4], 0
      %s330 = sshll.u32 [#allocation3], 4
      %s331 = int_to_ptr.vmem [resolvable:$true] %s330
      %s332 = sshll.u32 %s7, 4
      %s333 = int_to_ptr.hbm [resolvable:$true] %s332
      %335 = dma.vmem_to_hbm [thread:$0]  %s331, 16, %s333, [#allocation4]
    $region33: #{tpu_custom_call.1} parent=1 // pred_fallthru
      _
    // Predicated region
    $region34: #{tpu_custom_call.1} parent=1 // pred_check
      _
    $region35: #{tpu_custom_call.1} parent=1 // pred_check_branch
      %337 = sbr.rel (0) target = $region37
    $region36: #{tpu_custom_call.1} parent=1 // pred_region
      %339 = dma.done [#allocation4], 16
    $region37: #{tpu_custom_call.1} parent=1 // pred_fallthru
      _
    %340 = vsyncpa [#allocation4], 1

</llo_original>
